<compile_context>
chip_gen: v7x
topology: tpu7x:2x2x1
jax: 0.10.0
libtpu: 0.0.40
codegen_flags: <defaults>
</compile_context>

<pallas_src>
import jax
import jax.numpy as jnp
from jax.experimental import pallas as pl
from jax.experimental.pallas import tpu as pltpu


def _fidelity_kernel(o_ref, l_ref, out_ref, acc_ref):
    """o_ref, l_ref : (P, C, HW) VMEM tiles
    out_ref        : (1, 1) f32 output (sum of per-element fidelity ratios)
    acc_ref        : (P, HW) f32 persistent accumulator (VMEM scratch)
    """
    i = pl.program_id(0)

    @pl.when(i == 0)
    def _():
        acc_ref[...] = jnp.zeros_like(acc_ref)

    o = o_ref[...].astype(jnp.float32)          # (P, C, HW)
    l = l_ref[...].astype(jnp.float32)          # (P, C, HW)

    num = jnp.sum(o * l, axis=1)                                # (P, HW)
    den = jnp.sqrt(jnp.sum(o * o, axis=1)) * jnp.sqrt(jnp.sum(l * l, axis=1))
    ratio = num / den                                           # (P, HW)

    # Elementwise accumulate only (no cross-lane reduce, no masked scalar store
    # per step).
    acc_ref[...] += ratio

    @pl.when(i == pl.num_programs(0) - 1)
    def _():
        out_ref[...] = jnp.sum(acc_ref[...]).reshape(1, 1)


@jax.jit
def loss_fidelity(outputs, labels):
    """Pallas TPU implementation of Loss_Fidelity.forward (outputs, labels: NCHW)."""
    assert outputs.shape == labels.shape
    B, C, H, W = outputs.shape
    HW = H * W

    o = outputs.reshape(B, C, HW).astype(jnp.float32)
    l = labels.reshape(B, C, HW).astype(jnp.float32)

    # Pick the batch-block size so each input block is ~2 MiB (amortizes the
    # ~0.35 us per-grid-step overhead, stays well inside the scoped VMEM
    # default with 2 inputs x 2 pipeline buffers even on v7x's 64 MiB VMEM).
    row_bytes = C * HW * 4
    target_block_bytes = 2 * 1024 * 1024
    P = min(B, max(1, target_block_bytes // row_bytes))
    n_blocks = pl.cdiv(B, P)
    B_pad = n_blocks * P
    pad = B_pad - B
    if pad:
        # Pad with ones: each padded element contributes exactly 1.0 to the
        # accumulated ratio sum (num = C, den = C); subtracted below.
        ones = jnp.ones((pad, C, HW), jnp.float32)
        o = jnp.concatenate([o, ones], axis=0)
        l = jnp.concatenate([l, ones], axis=0)

    total = pl.pallas_call(
        _fidelity_kernel,
        out_shape=jax.ShapeDtypeStruct((1, 1), jnp.float32),
        grid_spec=pltpu.PrefetchScalarGridSpec(
            num_scalar_prefetch=0,
            grid=(n_blocks,),
            in_specs=[
                pl.BlockSpec((P, C, HW), lambda i: (i, 0, 0)),
                pl.BlockSpec((P, C, HW), lambda i: (i, 0, 0)),
            ],
            out_specs=pl.BlockSpec((1, 1), lambda i: (0, 0)),
            scratch_shapes=[pltpu.VMEM((P, HW), jnp.float32)],
        ),
        compiler_params=pltpu.CompilerParams(
            dimension_semantics=("arbitrary",),  # accumulator across the grid
        ),
    )(o, l)[0, 0]

    # Remove the padded-row contribution and take the mean over B*H*W.
    total = total - jnp.float32(pad * HW)
    return total / jnp.float32(B * HW)


def loss_fidelity_ref(outputs, labels):
    """Pure-JAX reference matching the PyTorch module exactly."""
    num = jnp.sum(outputs * labels, axis=1)
    den = jnp.sqrt(jnp.sum(outputs * outputs, axis=1)) * jnp.sqrt(
        jnp.sum(labels * labels, axis=1)
    )
    return jnp.mean(num / den)


if __name__ == "__main__":
    key = jax.random.PRNGKey(0)
    k1, k2 = jax.random.split(key)
    B, C, H, W = 2, 4, 16, 16
    outputs = jax.random.normal(k1, (B, C, H, W), dtype=jnp.float32)
    labels = jax.random.normal(k2, (B, C, H, W), dtype=jnp.float32)

    loss = loss_fidelity(outputs, labels)
    jax.block_until_ready(loss)

    ref = loss_fidelity_ref(outputs, labels)
    assert jnp.allclose(loss, ref, rtol=1e-5, atol=1e-5), (loss, ref)

    print("KERNEL_OK")
</pallas_src>

<mosaic_0001>
module attributes {stable_mosaic.version = 11 : i64} {
  func.func @_fidelity_kernel(%arg0: i32, %arg1: memref<2x4x256xf32, #tpu.memory_space<vmem>>, %arg2: memref<2x4x256xf32, #tpu.memory_space<vmem>>, %arg3: memref<1x1xf32, #tpu.memory_space<vmem>>, %arg4: memref<2x256xf32, #tpu.memory_space<vmem>>) attributes {dimension_semantics = [#tpu.dimension_semantics<arbitrary>], iteration_bounds = array<i64: 1>, scalar_prefetch = 0 : i64, scratch_operands = 1 : i64, tpu.core_type = #tpu.core_type<tc>, window_params = [{transform_indices = @transform_0, window_bounds = array<i64: 2, 4, 256>}, {transform_indices = @transform_1, window_bounds = array<i64: 2, 4, 256>}, {pipeline_mode = #tpu.pipeline_mode<synchronous>, transform_indices = @transform_2, window_bounds = array<i64: 1, 1>}]} {
    %c0_i32 = arith.constant 0 : i32
    %0 = arith.cmpi eq, %arg0, %c0_i32 : i32
    %1 = arith.extui %0 : i1 to i32
    %c0_i32_0 = arith.constant 0 : i32
    %2 = arith.cmpi ne, %1, %c0_i32_0 : i32
    scf.if %2 {
      %cst_14 = arith.constant 0.000000e+00 : f32
      %21 = vector.broadcast %cst_14 : f32 to vector<2x256xf32>
      %c0_15 = arith.constant 0 : index
      %c0_16 = arith.constant 0 : index
      %22 = vector.load %arg4[%c0_15, %c0_16] : memref<2x256xf32, #tpu.memory_space<vmem>>, vector<2x256xf32>
      tpu.vector_store %arg4[%c0_15, %c0_16], %21 {strides = array<i32>} : memref<2x256xf32, #tpu.memory_space<vmem>>, vector<2x256xf32>,
    } else {
    }
    %c0 = arith.constant 0 : index
    %c0_1 = arith.constant 0 : index
    %c0_2 = arith.constant 0 : index
    %3 = vector.load %arg1[%c0, %c0_1, %c0_2] : memref<2x4x256xf32, #tpu.memory_space<vmem>>, vector<2x4x256xf32>
    %c0_3 = arith.constant 0 : index
    %c0_4 = arith.constant 0 : index
    %c0_5 = arith.constant 0 : index
    %4 = vector.load %arg2[%c0_3, %c0_4, %c0_5] : memref<2x4x256xf32, #tpu.memory_space<vmem>>, vector<2x4x256xf32>
    %5 = arith.mulf %3, %4 : vector<2x4x256xf32>
    %cst = arith.constant dense<0.000000e+00> : vector<2x256xf32>
    %6 = vector.multi_reduction <add>, %5, %cst [1] : vector<2x4x256xf32> to vector<2x256xf32>
    %7 = arith.mulf %3, %3 : vector<2x4x256xf32>
    %cst_6 = arith.constant dense<0.000000e+00> : vector<2x256xf32>
    %8 = vector.multi_reduction <add>, %7, %cst_6 [1] : vector<2x4x256xf32> to vector<2x256xf32>
    %9 = math.sqrt %8 : vector<2x256xf32>
    %10 = arith.mulf %4, %4 : vector<2x4x256xf32>
    %cst_7 = arith.constant dense<0.000000e+00> : vector<2x256xf32>
    %11 = vector.multi_reduction <add>, %10, %cst_7 [1] : vector<2x4x256xf32> to vector<2x256xf32>
    %12 = math.sqrt %11 : vector<2x256xf32>
    %13 = arith.mulf %9, %12 : vector<2x256xf32>
    %14 = arith.divf %6, %13 : vector<2x256xf32>
    %c0_8 = arith.constant 0 : index
    %c0_9 = arith.constant 0 : index
    %15 = vector.load %arg4[%c0_8, %c0_9] : memref<2x256xf32, #tpu.memory_space<vmem>>, vector<2x256xf32>
    %16 = arith.addf %15, %14 : vector<2x256xf32>
    %c0_10 = arith.constant 0 : index
    %c0_11 = arith.constant 0 : index
    %17 = vector.load %arg4[%c0_10, %c0_11] : memref<2x256xf32, #tpu.memory_space<vmem>>, vector<2x256xf32>
    tpu.vector_store %arg4[%c0_10, %c0_11], %16 {strides = array<i32>} : memref<2x256xf32, #tpu.memory_space<vmem>>, vector<2x256xf32>,
    %c0_i32_12 = arith.constant 0 : i32
    %18 = arith.cmpi eq, %arg0, %c0_i32_12 : i32
    %19 = arith.extui %18 : i1 to i32
    %c0_i32_13 = arith.constant 0 : i32
    %20 = arith.cmpi ne, %19, %c0_i32_13 : i32
    scf.if %20 {
      %c0_14 = arith.constant 0 : index
      %c0_15 = arith.constant 0 : index
      %21 = vector.load %arg4[%c0_14, %c0_15] : memref<2x256xf32, #tpu.memory_space<vmem>>, vector<2x256xf32>
      %22 = vector.shape_cast %21 : vector<2x256xf32> to vector<1x2x256xf32>
      %cst_16 = arith.constant dense<0.000000e+00> : vector<1xf32>
      %23 = vector.multi_reduction <add>, %22, %cst_16 [1, 2] : vector<1x2x256xf32> to vector<1xf32>
      %24 = vector.shape_cast %23 : vector<1xf32> to vector<1x1x1xf32>
      %25 = vector.extract %24[0, 0, 0] : f32 from vector<1x1x1xf32>
      %26 = vector.broadcast %25 : f32 to vector<1x1xf32>
      %c0_17 = arith.constant 0 : index
      %c0_18 = arith.constant 0 : index
      %27 = vector.load %arg3[%c0_17, %c0_18] : memref<1x1xf32, #tpu.memory_space<vmem>>, vector<1x1xf32>
      tpu.vector_store %arg3[%c0_17, %c0_18], %26 {strides = array<i32>} : memref<1x1xf32, #tpu.memory_space<vmem>>, vector<1x1xf32>,
    } else {
    }
    return
  }
  func.func @transform_0(%arg0: i32) -> (i32, i32, i32) {
    %c0_i32 = arith.constant 0 : i32
    %c0_i32_0 = arith.constant 0 : i32
    %c0_i32_1 = arith.constant 0 : i32
    return %arg0, %c0_i32, %c0_i32_0 : i32, i32, i32
  }
  func.func @transform_1(%arg0: i32) -> (i32, i32, i32) {
    %c0_i32 = arith.constant 0 : i32
    %c0_i32_0 = arith.constant 0 : i32
    %c0_i32_1 = arith.constant 0 : i32
    return %arg0, %c0_i32, %c0_i32_0 : i32, i32, i32
  }
  func.func @transform_2(%arg0: i32) -> (i32, i32) {
    %c0_i32 = arith.constant 0 : i32
    %c0_i32_0 = arith.constant 0 : i32
    %c0_i32_1 = arith.constant 0 : i32
    return %c0_i32, %c0_i32_0 : i32, i32
  }
}

</mosaic_0001>

<llo_original>
// kernel: loss_fidelity.1
$region0: #{loss_fidelity.1}
  #allocation0 [shape = 'u32[]', space=smem, size = 0x4, offset = 0x4, fixed_abs, tag = 'smem constant byte address 0x4 - core index']
  #allocation1 [shape = 'u32[144,128]{1,0:T(1,128)}', space=vmem, size = 0x12000, scoped, tag = 'internal scratch']
  #allocation2 [shape = 'f32[2,256]{1,0:T(2,128)}', space=vmem, size = 0x800, scoped, tag = 'scratch operand']
  %s0 = inlined_call_operand.vmem [shape: f32[2,4,256], index: 0, kind: input, shape index: {}]
  %s1 = inlined_call_operand.vmem [shape: f32[2,4,256], index: 1, kind: input, shape index: {}]
  %s2 = inlined_call_operand.hbm [shape: f32[1,1], index: 2, kind: output, shape index: {}]
  %s3 = sld [smem:[#allocation0]]
  $region26: #{loss_fidelity.1} parent=0
    _
  %s5 = ssub.s32 1, %s3
  %s6 = scalar_select 0, %s5, %s3
  $region1: #{loss_fidelity.1} parent=0
    #allocation3 [shape = 'u8[512]{0}', space=vmem, size = 0x400, scoped, tag = 'output window, operand 0, single buffered']
    #allocation4 [shape = 's32[1]{0}', space=sflag, size = 0x4, scoped, tag = 'scoped memory for loss_fidelity.1']
    %7 = vsyncpa [#allocation4], 0
    // Predicated region
    $region2: #{loss_fidelity.1} parent=1 // pred_check
      _
    $region3: #{loss_fidelity.1} parent=1 // pred_check_branch
      %9 = sbr.rel (0) target = $region5
    $region4: #{loss_fidelity.1} parent=1 // pred_region
      _
    $region5: #{loss_fidelity.1} parent=1 // pred_fallthru
      _
    // Predicated region
    $region6: #{loss_fidelity.1} parent=1 // pred_check
      _
    $region7: #{loss_fidelity.1} parent=1 // pred_check_branch
      %11 = sbr.rel (0) target = $region9
    $region8: #{loss_fidelity.1} parent=1 // pred_region
      _
    $region9: #{loss_fidelity.1} parent=1 // pred_fallthru
      _
    %p12 = scmp.eq.s32.totalorder 0, 0
    // Predicated region
    $region10: #{loss_fidelity.1} parent=1 // pred_check
      %p13 = pneg %p12
    $region11: #{loss_fidelity.1} parent=1 // pred_check_branch
      %15 = sbr.rel (%p13) target = $region13
    $region12: #{loss_fidelity.1} parent=1 // pred_region
      %16 = vst [vmem:[#allocation2] sm:$0xf] 0.0
    $region13: #{loss_fidelity.1} parent=1 // pred_fallthru
      _
    %v17 = vld [vmem:[%s0] sm:$0xff]
    %v18 = vld [vmem:[%s0 + $0x8] sm:$0xff]
    %v19 = vld [vmem:[%s1] sm:$0xff]
    %v20 = vld [vmem:[%s1 + $0x8] sm:$0xff]
    %v21 = vmul.f32 %v17, %v19
    %v22 = vmul.f32 %v18, %v20
    %v25 = vcombine.high %v21, %v21
    %v26 = vcombine.high %v22, %v22
    %vm29 = vcmask 1043456
    %v30 = vsel %vm29, %v21, 0.0
    %v31 = vrot.slane %v30, 4
    %v32 = vadd.f32 %v30, %v31
    %v33 = vrot.slane %v32, 2
    %v34 = vadd.f32 %v32, %v33
    %v35 = vrot.slane %v34, 1
    %v36 = vadd.f32 %v34, %v35
    %v37 = vsel %vm29, %v25, 0.0
    %v38 = vrot.slane %v37, 4
    %v39 = vadd.f32 %v37, %v38
    %v40 = vrot.slane %v39, 2
    %v41 = vadd.f32 %v39, %v40
    %v42 = vrot.slane %v41, 1
    %v43 = vadd.f32 %v41, %v42
    %v44 = vsel %vm29, %v22, 0.0
    %v45 = vrot.slane %v44, 4
    %v46 = vadd.f32 %v44, %v45
    %v47 = vrot.slane %v46, 2
    %v48 = vadd.f32 %v46, %v47
    %v49 = vrot.slane %v48, 1
    %v50 = vadd.f32 %v48, %v49
    %v51 = vsel %vm29, %v26, 0.0
    %v52 = vrot.slane %v51, 4
    %v53 = vadd.f32 %v51, %v52
    %v54 = vrot.slane %v53, 2
    %v55 = vadd.f32 %v53, %v54
    %v56 = vrot.slane %v55, 1
    %v57 = vadd.f32 %v55, %v56
    %v58 = vmul.f32 %v17, %v17
    %v59 = vmul.f32 %v18, %v18
    %v62 = vcombine.high %v58, %v58
    %v63 = vcombine.high %v59, %v59
    %v66 = vsel %vm29, %v58, 0.0
    %v67 = vrot.slane %v66, 4
    %v68 = vadd.f32 %v66, %v67
    %v69 = vrot.slane %v68, 2
    %v70 = vadd.f32 %v68, %v69
    %v71 = vrot.slane %v70, 1
    %v72 = vadd.f32 %v70, %v71
    %v73 = vsel %vm29, %v62, 0.0
    %v74 = vrot.slane %v73, 4
    %v75 = vadd.f32 %v73, %v74
    %v76 = vrot.slane %v75, 2
    %v77 = vadd.f32 %v75, %v76
    %v78 = vrot.slane %v77, 1
    %v79 = vadd.f32 %v77, %v78
    %v80 = vsel %vm29, %v59, 0.0
    %v81 = vrot.slane %v80, 4
    %v82 = vadd.f32 %v80, %v81
    %v83 = vrot.slane %v82, 2
    %v84 = vadd.f32 %v82, %v83
    %v85 = vrot.slane %v84, 1
    %v86 = vadd.f32 %v84, %v85
    %v87 = vsel %vm29, %v63, 0.0
    %v88 = vrot.slane %v87, 4
    %v89 = vadd.f32 %v87, %v88
    %v90 = vrot.slane %v89, 2
    %v91 = vadd.f32 %v89, %v90
    %v92 = vrot.slane %v91, 1
    %v93 = vadd.f32 %v91, %v92
    %v94 = vrsqrt.pop %v72
    %v95 = vmul.f32 %v72, %v94
    %vm96 = vcmp.eq.f32.partialorder %v72, inf
    %v97 = vsel %vm96, %v72, %v95
    %vm98 = vcmp.eq.f32.partialorder %v72, 0.0
    %v99 = vand.u32 %v72, 2147483648
    %v100 = vsel %vm98, %v99, %v97
    %v101 = vrsqrt.pop %v79
    %v102 = vmul.f32 %v79, %v101
    %vm103 = vcmp.eq.f32.partialorder %v79, inf
    %v104 = vsel %vm103, %v79, %v102
    %vm105 = vcmp.eq.f32.partialorder %v79, 0.0
    %v106 = vand.u32 %v79, 2147483648
    %v107 = vsel %vm105, %v106, %v104
    %v108 = vrsqrt.pop %v86
    %v109 = vmul.f32 %v86, %v108
    %vm110 = vcmp.eq.f32.partialorder %v86, inf
    %v111 = vsel %vm110, %v86, %v109
    %vm112 = vcmp.eq.f32.partialorder %v86, 0.0
    %v113 = vand.u32 %v86, 2147483648
    %v114 = vsel %vm112, %v113, %v111
    %v115 = vrsqrt.pop %v93
    %v116 = vmul.f32 %v93, %v115
    %vm117 = vcmp.eq.f32.partialorder %v93, inf
    %v118 = vsel %vm117, %v93, %v116
    %vm119 = vcmp.eq.f32.partialorder %v93, 0.0
    %v120 = vand.u32 %v93, 2147483648
    %v121 = vsel %vm119, %v120, %v118
    %v122 = vmul.f32 %v19, %v19
    %v123 = vmul.f32 %v20, %v20
    %v126 = vcombine.high %v122, %v122
    %v127 = vcombine.high %v123, %v123
    %v130 = vsel %vm29, %v122, 0.0
    %v131 = vrot.slane %v130, 4
    %v132 = vadd.f32 %v130, %v131
    %v133 = vrot.slane %v132, 2
    %v134 = vadd.f32 %v132, %v133
    %v135 = vrot.slane %v134, 1
    %v136 = vadd.f32 %v134, %v135
    %v137 = vsel %vm29, %v126, 0.0
    %v138 = vrot.slane %v137, 4
    %v139 = vadd.f32 %v137, %v138
    %v140 = vrot.slane %v139, 2
    %v141 = vadd.f32 %v139, %v140
    %v142 = vrot.slane %v141, 1
    %v143 = vadd.f32 %v141, %v142
    %v144 = vsel %vm29, %v123, 0.0
    %v145 = vrot.slane %v144, 4
    %v146 = vadd.f32 %v144, %v145
    %v147 = vrot.slane %v146, 2
    %v148 = vadd.f32 %v146, %v147
    %v149 = vrot.slane %v148, 1
    %v150 = vadd.f32 %v148, %v149
    %v151 = vsel %vm29, %v127, 0.0
    %v152 = vrot.slane %v151, 4
    %v153 = vadd.f32 %v151, %v152
    %v154 = vrot.slane %v153, 2
    %v155 = vadd.f32 %v153, %v154
    %v156 = vrot.slane %v155, 1
    %v157 = vadd.f32 %v155, %v156
    %v158 = vrsqrt.pop %v136
    %v159 = vmul.f32 %v136, %v158
    %vm160 = vcmp.eq.f32.partialorder %v136, inf
    %v161 = vsel %vm160, %v136, %v159
    %vm162 = vcmp.eq.f32.partialorder %v136, 0.0
    %v163 = vand.u32 %v136, 2147483648
    %v164 = vsel %vm162, %v163, %v161
    %v165 = vrsqrt.pop %v143
    %v166 = vmul.f32 %v143, %v165
    %vm167 = vcmp.eq.f32.partialorder %v143, inf
    %v168 = vsel %vm167, %v143, %v166
    %vm169 = vcmp.eq.f32.partialorder %v143, 0.0
    %v170 = vand.u32 %v143, 2147483648
    %v171 = vsel %vm169, %v170, %v168
    %v172 = vrsqrt.pop %v150
    %v173 = vmul.f32 %v150, %v172
    %vm174 = vcmp.eq.f32.partialorder %v150, inf
    %v175 = vsel %vm174, %v150, %v173
    %vm176 = vcmp.eq.f32.partialorder %v150, 0.0
    %v177 = vand.u32 %v150, 2147483648
    %v178 = vsel %vm176, %v177, %v175
    %v179 = vrsqrt.pop %v157
    %v180 = vmul.f32 %v157, %v179
    %vm181 = vcmp.eq.f32.partialorder %v157, inf
    %v182 = vsel %vm181, %v157, %v180
    %vm183 = vcmp.eq.f32.partialorder %v157, 0.0
    %v184 = vand.u32 %v157, 2147483648
    %v185 = vsel %vm183, %v184, %v182
    %v186 = vmul.f32 %v100, %v164
    %v187 = vmul.f32 %v107, %v171
    %v188 = vmul.f32 %v114, %v178
    %v189 = vmul.f32 %v121, %v185
    %v190 = vrcp.pop %v186
    %v191 = vmul.f32 %v36, %v190
    %v192 = vrcp.pop %v187
    %v193 = vmul.f32 %v43, %v192
    %v194 = vrcp.pop %v188
    %v195 = vmul.f32 %v50, %v194
    %v196 = vrcp.pop %v189
    %v197 = vmul.f32 %v57, %v196
    %v198 = vld [vmem:[#allocation2] sm:$0xf]
    %v203 = vcombine.low %v191, %v193
    %v205 = vunpack.c.l.s4 1983009808
    %v206 = vunpack.c.0.s8 %v205
    %v207 = vlaneseq
    %v208 = vshrl.u32 %v207, 7
    %v209 = vsub.s32 %v206, %v208
    %v210 = vrot.slane %v203, %v209
    %v211 = vcombine.low %v195, %v197
    %v213 = vunpack.c.l.s4 1983009808
    %v214 = vunpack.c.0.s8 %v213
    %v215 = vlaneseq
    %v216 = vshrl.u32 %v215, 7
    %v217 = vsub.s32 %v214, %v216
    %v218 = vrot.slane %v211, %v217
    %vm219 = vcmask 1044484
    %v220 = vsel %vm219, %v210, %v210
    %vm221 = vcmask 1046534
    %v222 = vsel %vm221, %v210, %v220
    %v223 = vrot.slane %v218, 7
    %vm224 = vcmask 1041409
    %v225 = vsel %vm224, %v223, %v222
    %vm226 = vcmask 1043459
    %v227 = vsel %vm226, %v223, %v225
    %vm228 = vcmask 1045509
    %v229 = vsel %vm228, %v223, %v227
    %vm230 = vcmask 1047559
    %v231 = vsel %vm230, %v223, %v229
    %v233 = vadd.f32 %v198, %v231
    %234 = vst [vmem:[#allocation2] sm:$0xf] %v233
    // Predicated region
    $region14: #{loss_fidelity.1} parent=1 // pred_check
      %p235 = pneg %p12
    $region15: #{loss_fidelity.1} parent=1 // pred_check_branch
      %237 = sbr.rel (%p235) target = $region17
    $region16: #{loss_fidelity.1} parent=1 // pred_region
      %v238 = vld [vmem:[#allocation2] sm:$0xf]
      %v241 = vunpack.c.l.s4 1983009808
      %v242 = vunpack.c.0.s8 %v241
      %v243 = vlaneseq
      %v244 = vshrl.u32 %v243, 7
      %v245 = vsub.s32 %v242, %v244
      %v246 = vrot.slane %v238, %v245
      %v247 = vcombine.high %v246, %v246
      %vm250 = vcmask 1041408
      %v251 = vsel %vm250, %v246, 0.0
      %v252 = vsel %vm250, %v247, 0.0
      %v253 = vadd.f32 %v251, %v252
      %254 = vadd.xlane.f32.xlu0 %v253
      %v255 = vpop.xlane.xlu0 %254
      %v256 = vrot.slane %v255, 4
      %v257 = vadd.f32 %v255, %v256
      %v258 = vrot.slane %v257, 2
      %v259 = vadd.f32 %v257, %v258
      %v260 = vrot.slane %v259, 1
      %v261 = vadd.f32 %v259, %v260
      %s262 = vtos %v261
      %v263 = vstv %s262
      %vm264 = vcmask 0
      %265 = vst.msk [vmem:[#allocation3] sm:$0x1] %vm264, %v263
    $region17: #{loss_fidelity.1} parent=1 // pred_fallthru
      _
    // Predicated region
    $region18: #{loss_fidelity.1} parent=1 // pred_check
      _
    $region19: #{loss_fidelity.1} parent=1 // pred_check_branch
      %267 = sbr.rel (0) target = $region21
    $region20: #{loss_fidelity.1} parent=1 // pred_region
      %s269 = ssub.s32 16, 16
      %270 = vsyncadd [#allocation4], %s269
      %s272 = sshll.u32 [#allocation3], 4
      %s273 = int_to_ptr.vmem [resolvable:$true] %s272
      %275 = dma.vmem_to_hbm [thread:$0]  %s273, 16, %s2, [#allocation4]
    $region21: #{loss_fidelity.1} parent=1 // pred_fallthru
      _
    // Predicated region
    $region22: #{loss_fidelity.1} parent=1 // pred_check
      _
    $region23: #{loss_fidelity.1} parent=1 // pred_check_branch
      %277 = sbr.rel (0) target = $region25
    $region24: #{loss_fidelity.1} parent=1 // pred_region
      %278 = dma.done [#allocation4], 16
    $region25: #{loss_fidelity.1} parent=1 // pred_fallthru
      _
    %279 = vsyncpa [#allocation4], 1

</llo_original>
